<compile_context>
chip_gen: v7x
topology: tpu7x:2x2x1
jax: 0.10.0
libtpu: 0.0.40
codegen_flags: <defaults>
</compile_context>

<pallas_src>
import jax
import jax.numpy as jnp
from jax.experimental import pallas as pl
from jax.experimental.pallas import tpu as pltpu


def _cfg_denoise_kernel(sigma_ref, cscale_ref,            # SMEM scalars
                        x_ref, tok_ref,                   # VMEM activations (bf16)
                        w1t_ref, b1t_ref, wct_ref, w2t_ref, b2t_ref,  # VMEM weights
                        out_ref,                          # VMEM (1, C, HW)
                        h_scr):                           # VMEM (Hd, 2*HW) bf16 scratch
    b = pl.program_id(0)
    HW = x_ref.shape[2]
    T = tok_ref.shape[2] // 2

    cond_scale = cscale_ref[0]
    sigma = sigma_ref[b]
    c_in = 1.0 / jnp.sqrt(sigma * sigma + 1.0)
    c_out = sigma

    xb = x_ref[0]                                         # (C, HW) bf16
    xb_f32 = xb.astype(jnp.float32)
    # Fold c_in into the small (C, HW) MXU operand (matches the reference's
    # bf16 preconditioned-input) instead of scaling the (Hd, HW) f32 result.
    x_in = (c_in * xb_f32).astype(jnp.bfloat16)

    # Shared branch: channel-mix 1x1 conv. bf16 MXU operands, f32 accumulation.
    lin = jnp.dot(w1t_ref[...], x_in,
                  preferred_element_type=jnp.float32) + b1t_ref[...]       # (Hd, HW)

    # Pooled-token cross conditioning for BOTH branches in one MXU call:
    # (Hd, Dc) @ (Dc, 2T) -> (Hd, 2T); mean-pool over tokens after the matmul.
    bt = jnp.dot(wct_ref[...], tok_ref[0],
                 preferred_element_type=jnp.float32)                        # (Hd, 2T)
    bias_u = jnp.mean(bt[:, :T], axis=1, keepdims=True)                     # (Hd, 1)
    bias_c = jnp.mean(bt[:, T:], axis=1, keepdims=True)                     # (Hd, 1)

    h_u = jax.nn.gelu(lin + bias_u)                                         # (Hd, HW) f32
    h_c = jax.nn.gelu(lin + bias_c)

    # Lane-concat [h_u | h_c] as bf16 into scratch -> ONE (Hd, 2*HW) MXU call;
    # CFG combine in f32 AFTER the projection (matches the reference ordering,
    # no f32 h_mix temporary, no hi/lo split passes).
    h_scr[:, :HW] = h_u.astype(jnp.bfloat16)
    h_scr[:, HW:] = h_c.astype(jnp.bfloat16)
    res = jnp.dot(w2t_ref[...], h_scr[...],
                  preferred_element_type=jnp.float32)                       # (C, 2*HW)
    res_u = res[:, :HW]
    res_c = res[:, HW:]
    guided = res_u + cond_scale * (res_c - res_u)                           # (C, HW) f32

    # Residual + sigma output scale in f32; store in the requested out dtype.
    # NOTE: x is carried as bf16 (matches the synthetic bf16 denoiser); pass a
    # separate f32 residual stream if the real inner model keeps x in f32.
    out_ref[0] = (xb_f32 + c_out * (guided + b2t_ref[...])).astype(out_ref.dtype)
    # TODO(synk): thresholder is None in this configuration; no-op here.


def stable_interface_forward(x_nchw, sigma, uncond, cond, cond_scale, params,
                             out_dtype=jnp.float32):
    B, C, H, W = x_nchw.shape
    HW = H * W
    T, Dc = uncond.shape[1], uncond.shape[2]
    Hd = params["w1"].shape[1]

    # Lane-dense layout: NCHW -> (B, C, HW) is a pure reshape (no transpose);
    # HW=256 is a multiple of 128 => dense vector stores.
    x3d = x_nchw.reshape(B, C, HW).astype(jnp.bfloat16)

    # Conditioning tokens: (B, T, Dc) -> (B, Dc, T), uncond/cond lane-concatenated
    # so one matmul serves both branches.  (Tiny tensor; transpose is free glue.)
    tok = jnp.concatenate(
        [jnp.swapaxes(uncond, 1, 2), jnp.swapaxes(cond, 1, 2)], axis=2
    ).astype(jnp.bfloat16)                                          # (B, Dc, 2T)

    sigma = sigma.astype(jnp.float32)
    cscale = jnp.asarray([cond_scale], dtype=jnp.float32)

    # Transposed weights so every matmul result keeps HW on the lane axis.
    w1t = params["w1"].T.astype(jnp.bfloat16)                       # (Hd, C)
    wct = params["wc"].T.astype(jnp.bfloat16)                       # (Hd, Dc)
    w2t = params["w2"].T.astype(jnp.bfloat16)                       # (C, Hd)
    b1t = params["b1"].reshape(Hd, 1).astype(jnp.float32)           # (Hd, 1)
    b2t = params["b2"].reshape(C, 1).astype(jnp.float32)            # (C, 1)

    grid_spec = pltpu.PrefetchScalarGridSpec(
        num_scalar_prefetch=0,
        # Batch on the grid: parallel across TensorCores on v7x, serial (and
        # nearly free) on single-TC v5e/v6e.  A v5e/v6e-only variant would
        # instead lane-concat the batches into one (C, B*HW) matmul per layer.
        grid=(B,),
        in_specs=[
            pl.BlockSpec(memory_space=pltpu.MemorySpace.SMEM),      # sigma (B,)
            pl.BlockSpec(memory_space=pltpu.MemorySpace.SMEM),      # cond_scale (1,)
            pl.BlockSpec((1, C, HW), lambda b: (b, 0, 0)),          # x  (per-batch block)
            pl.BlockSpec((1, Dc, 2 * T), lambda b: (b, 0, 0)),      # tokens
            pl.BlockSpec((Hd, C), lambda b: (0, 0)),                # w1t (loaded once)
            pl.BlockSpec((Hd, 1), lambda b: (0, 0)),                # b1t
            pl.BlockSpec((Hd, Dc), lambda b: (0, 0)),               # wct
            pl.BlockSpec((C, Hd), lambda b: (0, 0)),                # w2t
            pl.BlockSpec((C, 1), lambda b: (0, 0)),                 # b2t
        ],
        out_specs=pl.BlockSpec((1, C, HW), lambda b: (b, 0, 0)),
        scratch_shapes=[pltpu.VMEM((Hd, 2 * HW), jnp.bfloat16)],    # [h_u | h_c]
    )

    out3d = pl.pallas_call(
        _cfg_denoise_kernel,
        grid_spec=grid_spec,
        out_shape=jax.ShapeDtypeStruct((B, C, HW), out_dtype),
        compiler_params=pltpu.CompilerParams(
            dimension_semantics=("parallel",)),
    )(sigma, cscale, x3d, tok, w1t, b1t, wct, w2t, b2t)

    return out3d.reshape(B, C, H, W)


# ---------------- pure-JAX reference (literal cat / chunk path) ----------------

def _inner_model_ref(x_nchw, sigma, cond_tokens, params):
    """Synthetic denoiser: sigma-preconditioned 1x1-conv MLP with pooled-token
    cross conditioning.  bf16 weights/activations at the matmuls, f32 math."""
    N, C, H, W = x_nchw.shape
    f32, bf16 = jnp.float32, jnp.bfloat16
    hp = jax.lax.Precision.HIGHEST
    x = x_nchw.astype(bf16).astype(f32).reshape(N, C, H * W)
    tok = cond_tokens.astype(bf16).astype(f32)
    w1 = params["w1"].astype(bf16).astype(f32)
    wc = params["wc"].astype(bf16).astype(f32)
    w2 = params["w2"].astype(bf16).astype(f32)
    b1 = params["b1"].astype(f32).reshape(1, -1, 1)                 # (1, Hd, 1)
    b2 = params["b2"].astype(f32).reshape(1, -1, 1)                 # (1, C, 1)
    c_in = (1.0 / jnp.sqrt(sigma.astype(f32) ** 2 + 1.0))[:, None, None]
    c_out = sigma.astype(f32)[:, None, None]

    # Preconditioned input is a bf16 activation into the first matmul.
    x_in = (c_in * x).astype(bf16).astype(f32)
    lin = jnp.einsum("ch,ncw->nhw", w1, x_in, precision=hp) + b1
    pooled = jnp.mean(tok, axis=1)                                  # (N, Dc)
    bias = jnp.einsum("nd,dh->nh", pooled, wc, precision=hp)        # (N, Hd)
    # Hidden activation is bf16 into the output projection (bf16 network).
    h = jax.nn.gelu(lin + bias[:, :, None]).astype(bf16).astype(f32)
    eps = x + c_out * (jnp.einsum("hc,nhw->ncw", w2, h, precision=hp) + b2)
    return eps.reshape(N, C, H, W)


def stable_interface_ref(x, sigma, uncond, cond, cond_scale, params):
    x_two = jnp.concatenate([x, x], axis=0)
    sigma_two = jnp.concatenate([sigma, sigma], axis=0)
    cond_full = jnp.concatenate([uncond, cond], axis=0)
    out = _inner_model_ref(x_two, sigma_two, cond_full, params)
    uncond_out, cond_out = jnp.split(out, 2, axis=0)
    return uncond_out + (cond_out - uncond_out) * cond_scale


# ------------------------------------ main -------------------------------------

if __name__ == "__main__":
    B, C, H, W = 2, 4, 16, 16       # latent image
    T, Dc = 8, 32                   # conditioning tokens
    Hd = 32                         # denoiser hidden width
    cond_scale = 7.5

    key = jax.random.PRNGKey(0)
    k_x, k_s, k_u, k_c, k_w1, k_b1, k_wc, k_w2, k_b2 = jax.random.split(key, 9)

    x = jax.random.normal(k_x, (B, C, H, W), dtype=jnp.float32)
    sigma = jax.random.uniform(k_s, (B,), dtype=jnp.float32, minval=0.5, maxval=2.0)
    uncond = jax.random.normal(k_u, (B, T, Dc), dtype=jnp.float32)
    cond = jax.random.normal(k_c, (B, T, Dc), dtype=jnp.float32)

    params = {
        "w1": jax.random.normal(k_w1, (C, Hd), dtype=jnp.float32) * 0.2,
        "b1": jax.random.normal(k_b1, (1, Hd), dtype=jnp.float32) * 0.1,
        "wc": jax.random.normal(k_wc, (Dc, Hd), dtype=jnp.float32) * 0.1,
        "w2": jax.random.normal(k_w2, (Hd, C), dtype=jnp.float32) * 0.2,
        "b2": jax.random.normal(k_b2, (1, C), dtype=jnp.float32) * 0.05,
    }

    # bf16 output (internal math in f32) — halves HBM writeback at production sizes.
    out = jax.block_until_ready(
        stable_interface_forward(x, sigma, uncond, cond, cond_scale, params,
                                 out_dtype=jnp.bfloat16))
    ref = jax.block_until_ready(
        stable_interface_ref(x, sigma, uncond, cond, cond_scale, params))

    assert out.shape == (B, C, H, W), out.shape
    out_f32 = out.astype(jnp.float32)
    max_err = float(jnp.max(jnp.abs(out_f32 - ref)))
    # bf16 activations at the MXU with f32 accumulation, CFG amplification by
    # cond_scale (7.5x) and bf16 output storage; tolerance leaves margin for
    # MXU-vs-XLA accumulation-order and transcendental (gelu/tanh) differences.
    assert jnp.allclose(out_f32, ref, atol=1e-2, rtol=1e-2), max_err
    print("KERNEL_OK")
</pallas_src>

<mosaic_0001>
module attributes {stable_mosaic.version = 11 : i64} {
  func.func @_cfg_denoise_kernel(%arg0: i32, %arg1: memref<2xf32, #tpu.memory_space<smem>>, %arg2: memref<1xf32, #tpu.memory_space<smem>>, %arg3: memref<1x4x256xbf16, #tpu.memory_space<vmem>>, %arg4: memref<1x32x16xbf16, #tpu.memory_space<vmem>>, %arg5: memref<32x4xbf16, #tpu.memory_space<vmem>>, %arg6: memref<32x1xf32, #tpu.memory_space<vmem>>, %arg7: memref<32x32xbf16, #tpu.memory_space<vmem>>, %arg8: memref<4x32xbf16, #tpu.memory_space<vmem>>, %arg9: memref<4x1xf32, #tpu.memory_space<vmem>>, %arg10: memref<1x4x256xbf16, #tpu.memory_space<vmem>>, %arg11: memref<32x512xbf16, #tpu.memory_space<vmem>>) attributes {dimension_semantics = [#tpu.dimension_semantics<parallel>], iteration_bounds = array<i64: 2>, scalar_prefetch = 0 : i64, scratch_operands = 1 : i64, tpu.core_type = #tpu.core_type<tc>, window_params = [{transform_indices = @transform_0, window_bounds = array<i64: 2>}, {transform_indices = @transform_1, window_bounds = array<i64: 1>}, {transform_indices = @transform_2, window_bounds = array<i64: 1, 4, 256>}, {transform_indices = @transform_3, window_bounds = array<i64: 1, 32, 16>}, {pipeline_mode = #tpu.pipeline_mode<synchronous>, transform_indices = @transform_4, window_bounds = array<i64: 32, 4>}, {pipeline_mode = #tpu.pipeline_mode<synchronous>, transform_indices = @transform_5, window_bounds = array<i64: 32, 1>}, {pipeline_mode = #tpu.pipeline_mode<synchronous>, transform_indices = @transform_6, window_bounds = array<i64: 32, 32>}, {pipeline_mode = #tpu.pipeline_mode<synchronous>, transform_indices = @transform_7, window_bounds = array<i64: 4, 32>}, {pipeline_mode = #tpu.pipeline_mode<synchronous>, transform_indices = @transform_8, window_bounds = array<i64: 4, 1>}, {transform_indices = @transform_9, window_bounds = array<i64: 1, 4, 256>}]} {
    %c0 = arith.constant 0 : index
    %0 = memref.load %arg2[%c0] : memref<1xf32, #tpu.memory_space<smem>>
    %1 = arith.index_cast %arg0 : i32 to index
    %2 = memref.load %arg1[%1] : memref<2xf32, #tpu.memory_space<smem>>
    %3 = arith.mulf %2, %2 : f32
    %cst = arith.constant 1.000000e+00 : f32
    %4 = arith.addf %3, %cst : f32
    %5 = math.sqrt %4 : f32
    %cst_0 = arith.constant 1.000000e+00 : f32
    %6 = arith.divf %cst_0, %5 : f32
    %c0_1 = arith.constant 0 : index
    %c0_2 = arith.constant 0 : index
    %c0_3 = arith.constant 0 : index
    %7 = vector.load %arg3[%c0_1, %c0_2, %c0_3] : memref<1x4x256xbf16, #tpu.memory_space<vmem>>, vector<1x4x256xbf16>
    %8 = vector.shape_cast %7 : vector<1x4x256xbf16> to vector<4x256xbf16>
    %9 = arith.extf %8 : vector<4x256xbf16> to vector<4x256xf32>
    %10 = vector.broadcast %6 : f32 to vector<4x256xf32>
    %11 = arith.mulf %10, %9 : vector<4x256xf32>
    %12 = arith.truncf %11 : vector<4x256xf32> to vector<4x256xbf16>
    %c0_4 = arith.constant 0 : index
    %c0_5 = arith.constant 0 : index
    %13 = vector.load %arg5[%c0_4, %c0_5] : memref<32x4xbf16, #tpu.memory_space<vmem>>, vector<32x4xbf16>
    %cst_6 = arith.constant dense<0.000000e+00> : vector<32x256xf32>
    %14 = tpu.matmul %13, %12, %cst_6 {dimension_numbers = #tpu.dot_dimension_numbers<[1], [0], [0], [1], [0, 0, 1, 1], [], []>} : vector<32x4xbf16>, vector<4x256xbf16>, vector<32x256xf32> -> vector<32x256xf32>
    %c0_7 = arith.constant 0 : index
    %c0_8 = arith.constant 0 : index
    %15 = vector.load %arg6[%c0_7, %c0_8] : memref<32x1xf32, #tpu.memory_space<vmem>>, vector<32x1xf32>
    %16 = vector.broadcast %15 : vector<32x1xf32> to vector<32x256xf32>
    %17 = arith.addf %14, %16 : vector<32x256xf32>
    %c0_9 = arith.constant 0 : index
    %c0_10 = arith.constant 0 : index
    %18 = vector.load %arg7[%c0_9, %c0_10] : memref<32x32xbf16, #tpu.memory_space<vmem>>, vector<32x32xbf16>
    %c0_11 = arith.constant 0 : index
    %c0_12 = arith.constant 0 : index
    %c0_13 = arith.constant 0 : index
    %19 = vector.load %arg4[%c0_11, %c0_12, %c0_13] : memref<1x32x16xbf16, #tpu.memory_space<vmem>>, vector<1x32x16xbf16>
    %20 = vector.shape_cast %19 : vector<1x32x16xbf16> to vector<32x16xbf16>
    %cst_14 = arith.constant dense<0.000000e+00> : vector<32x16xf32>
    %21 = tpu.matmul %18, %20, %cst_14 {dimension_numbers = #tpu.dot_dimension_numbers<[1], [0], [0], [1], [0, 0, 1, 1], [], []>} : vector<32x32xbf16>, vector<32x16xbf16>, vector<32x16xf32> -> vector<32x16xf32>
    %22 = vector.extract_strided_slice %21 {offsets = [0, 0], sizes = [32, 8], strides = [1, 1]} : vector<32x16xf32> to vector<32x8xf32>
    %cst_15 = arith.constant dense<0.000000e+00> : vector<32xf32>
    %23 = vector.multi_reduction <add>, %22, %cst_15 [1] : vector<32x8xf32> to vector<32xf32>
    %24 = vector.shape_cast %23 : vector<32xf32> to vector<32x1xf32>
    %cst_16 = arith.constant 8.000000e+00 : f32
    %25 = vector.broadcast %cst_16 : f32 to vector<32x1xf32>
    %26 = arith.divf %24, %25 : vector<32x1xf32>
    %27 = vector.extract_strided_slice %21 {offsets = [0, 8], sizes = [32, 8], strides = [1, 1]} : vector<32x16xf32> to vector<32x8xf32>
    %cst_17 = arith.constant dense<0.000000e+00> : vector<32xf32>
    %28 = vector.multi_reduction <add>, %27, %cst_17 [1] : vector<32x8xf32> to vector<32xf32>
    %29 = vector.shape_cast %28 : vector<32xf32> to vector<32x1xf32>
    %cst_18 = arith.constant 8.000000e+00 : f32
    %30 = vector.broadcast %cst_18 : f32 to vector<32x1xf32>
    %31 = arith.divf %29, %30 : vector<32x1xf32>
    %32 = vector.broadcast %26 : vector<32x1xf32> to vector<32x256xf32>
    %33 = arith.addf %17, %32 : vector<32x256xf32>
    %34 = arith.mulf %33, %33 : vector<32x256xf32>
    %35 = arith.mulf %33, %34 : vector<32x256xf32>
    %cst_19 = arith.constant 4.471500e-02 : f32
    %36 = vector.broadcast %cst_19 : f32 to vector<32x256xf32>
    %37 = arith.mulf %36, %35 : vector<32x256xf32>
    %38 = arith.addf %33, %37 : vector<32x256xf32>
    %cst_20 = arith.constant 0.797884583 : f32
    %39 = vector.broadcast %cst_20 : f32 to vector<32x256xf32>
    %40 = arith.mulf %39, %38 : vector<32x256xf32>
    %41 = math.tanh %40 : vector<32x256xf32>
    %cst_21 = arith.constant 1.000000e+00 : f32
    %42 = vector.broadcast %cst_21 : f32 to vector<32x256xf32>
    %43 = arith.addf %42, %41 : vector<32x256xf32>
    %cst_22 = arith.constant 5.000000e-01 : f32
    %44 = vector.broadcast %cst_22 : f32 to vector<32x256xf32>
    %45 = arith.mulf %44, %43 : vector<32x256xf32>
    %46 = arith.mulf %33, %45 : vector<32x256xf32>
    %47 = vector.broadcast %31 : vector<32x1xf32> to vector<32x256xf32>
    %48 = arith.addf %17, %47 : vector<32x256xf32>
    %49 = arith.mulf %48, %48 : vector<32x256xf32>
    %50 = arith.mulf %48, %49 : vector<32x256xf32>
    %cst_23 = arith.constant 4.471500e-02 : f32
    %51 = vector.broadcast %cst_23 : f32 to vector<32x256xf32>
    %52 = arith.mulf %51, %50 : vector<32x256xf32>
    %53 = arith.addf %48, %52 : vector<32x256xf32>
    %cst_24 = arith.constant 0.797884583 : f32
    %54 = vector.broadcast %cst_24 : f32 to vector<32x256xf32>
    %55 = arith.mulf %54, %53 : vector<32x256xf32>
    %56 = math.tanh %55 : vector<32x256xf32>
    %cst_25 = arith.constant 1.000000e+00 : f32
    %57 = vector.broadcast %cst_25 : f32 to vector<32x256xf32>
    %58 = arith.addf %57, %56 : vector<32x256xf32>
    %cst_26 = arith.constant 5.000000e-01 : f32
    %59 = vector.broadcast %cst_26 : f32 to vector<32x256xf32>
    %60 = arith.mulf %59, %58 : vector<32x256xf32>
    %61 = arith.mulf %48, %60 : vector<32x256xf32>
    %62 = arith.truncf %46 : vector<32x256xf32> to vector<32x256xbf16>
    %c0_27 = arith.constant 0 : index
    %c0_28 = arith.constant 0 : index
    %63 = vector.load %arg11[%c0_27, %c0_28] : memref<32x512xbf16, #tpu.memory_space<vmem>>, vector<32x256xbf16>
    tpu.vector_store %arg11[%c0_27, %c0_28], %62 {strides = array<i32>} : memref<32x512xbf16, #tpu.memory_space<vmem>>, vector<32x256xbf16>,
    %64 = arith.truncf %61 : vector<32x256xf32> to vector<32x256xbf16>
    %c0_29 = arith.constant 0 : index
    %c256 = arith.constant 256 : index
    %65 = vector.load %arg11[%c0_29, %c256] : memref<32x512xbf16, #tpu.memory_space<vmem>>, vector<32x256xbf16>
    tpu.vector_store %arg11[%c0_29, %c256], %64 {strides = array<i32>} : memref<32x512xbf16, #tpu.memory_space<vmem>>, vector<32x256xbf16>,
    %c0_30 = arith.constant 0 : index
    %c0_31 = arith.constant 0 : index
    %66 = vector.load %arg8[%c0_30, %c0_31] : memref<4x32xbf16, #tpu.memory_space<vmem>>, vector<4x32xbf16>
    %c0_32 = arith.constant 0 : index
    %c0_33 = arith.constant 0 : index
    %67 = vector.load %arg11[%c0_32, %c0_33] : memref<32x512xbf16, #tpu.memory_space<vmem>>, vector<32x512xbf16>
    %cst_34 = arith.constant dense<0.000000e+00> : vector<4x512xf32>
    %68 = tpu.matmul %66, %67, %cst_34 {dimension_numbers = #tpu.dot_dimension_numbers<[1], [0], [0], [1], [0, 0, 1, 1], [], []>} : vector<4x32xbf16>, vector<32x512xbf16>, vector<4x512xf32> -> vector<4x512xf32>
    %69 = vector.extract_strided_slice %68 {offsets = [0, 0], sizes = [4, 256], strides = [1, 1]} : vector<4x512xf32> to vector<4x256xf32>
    %70 = vector.extract_strided_slice %68 {offsets = [0, 256], sizes = [4, 256], strides = [1, 1]} : vector<4x512xf32> to vector<4x256xf32>
    %71 = arith.subf %70, %69 : vector<4x256xf32>
    %72 = vector.broadcast %0 : f32 to vector<4x256xf32>
    %73 = arith.mulf %72, %71 : vector<4x256xf32>
    %74 = arith.addf %69, %73 : vector<4x256xf32>
    %c0_35 = arith.constant 0 : index
    %c0_36 = arith.constant 0 : index
    %75 = vector.load %arg9[%c0_35, %c0_36] : memref<4x1xf32, #tpu.memory_space<vmem>>, vector<4x1xf32>
    %76 = vector.broadcast %75 : vector<4x1xf32> to vector<4x256xf32>
    %77 = arith.addf %74, %76 : vector<4x256xf32>
    %78 = vector.broadcast %2 : f32 to vector<4x256xf32>
    %79 = arith.mulf %78, %77 : vector<4x256xf32>
    %80 = arith.addf %9, %79 : vector<4x256xf32>
    %81 = arith.truncf %80 : vector<4x256xf32> to vector<4x256xbf16>
    %c0_37 = arith.constant 0 : index
    %c0_38 = arith.constant 0 : index
    %c0_39 = arith.constant 0 : index
    %82 = vector.load %arg10[%c0_37, %c0_38, %c0_39] : memref<1x4x256xbf16, #tpu.memory_space<vmem>>, vector<1x4x256xbf16>
    %83 = vector.shape_cast %82 : vector<1x4x256xbf16> to vector<4x256xbf16>
    %84 = vector.shape_cast %81 : vector<4x256xbf16> to vector<1x4x256xbf16>
    tpu.vector_store %arg10[%c0_37, %c0_38, %c0_39], %84 {strides = array<i32>} : memref<1x4x256xbf16, #tpu.memory_space<vmem>>, vector<1x4x256xbf16>,
    return
  }
  func.func @transform_0(%arg0: i32) -> i32 {
    %c0_i32 = arith.constant 0 : i32
    %c0_i32_0 = arith.constant 0 : i32
    return %c0_i32 : i32
  }
  func.func @transform_1(%arg0: i32) -> i32 {
    %c0_i32 = arith.constant 0 : i32
    %c0_i32_0 = arith.constant 0 : i32
    return %c0_i32 : i32
  }
  func.func @transform_2(%arg0: i32) -> (i32, i32, i32) {
    %c0_i32 = arith.constant 0 : i32
    %c0_i32_0 = arith.constant 0 : i32
    %c0_i32_1 = arith.constant 0 : i32
    return %arg0, %c0_i32, %c0_i32_0 : i32, i32, i32
  }
  func.func @transform_3(%arg0: i32) -> (i32, i32, i32) {
    %c0_i32 = arith.constant 0 : i32
    %c0_i32_0 = arith.constant 0 : i32
    %c0_i32_1 = arith.constant 0 : i32
    return %arg0, %c0_i32, %c0_i32_0 : i32, i32, i32
  }
  func.func @transform_4(%arg0: i32) -> (i32, i32) {
    %c0_i32 = arith.constant 0 : i32
    %c0_i32_0 = arith.constant 0 : i32
    %c0_i32_1 = arith.constant 0 : i32
    return %c0_i32, %c0_i32_0 : i32, i32
  }
  func.func @transform_5(%arg0: i32) -> (i32, i32) {
    %c0_i32 = arith.constant 0 : i32
    %c0_i32_0 = arith.constant 0 : i32
    %c0_i32_1 = arith.constant 0 : i32
    return %c0_i32, %c0_i32_0 : i32, i32
  }
  func.func @transform_6(%arg0: i32) -> (i32, i32) {
    %c0_i32 = arith.constant 0 : i32
    %c0_i32_0 = arith.constant 0 : i32
    %c0_i32_1 = arith.constant 0 : i32
    return %c0_i32, %c0_i32_0 : i32, i32
  }
  func.func @transform_7(%arg0: i32) -> (i32, i32) {
    %c0_i32 = arith.constant 0 : i32
    %c0_i32_0 = arith.constant 0 : i32
    %c0_i32_1 = arith.constant 0 : i32
    return %c0_i32, %c0_i32_0 : i32, i32
  }
  func.func @transform_8(%arg0: i32) -> (i32, i32) {
    %c0_i32 = arith.constant 0 : i32
    %c0_i32_0 = arith.constant 0 : i32
    %c0_i32_1 = arith.constant 0 : i32
    return %c0_i32, %c0_i32_0 : i32, i32
  }
  func.func @transform_9(%arg0: i32) -> (i32, i32, i32) {
    %c0_i32 = arith.constant 0 : i32
    %c0_i32_0 = arith.constant 0 : i32
    %c0_i32_1 = arith.constant 0 : i32
    return %arg0, %c0_i32, %c0_i32_0 : i32, i32, i32
  }
}

</mosaic_0001>

<llo_original>
// kernel: tpu_custom_call.1
$region0: #{tpu_custom_call.1}
  #allocation0 [shape = 'u32[]', space=smem, size = 0x4, offset = 0x4, fixed_abs, tag = 'smem constant byte address 0x4 - core index']
  #allocation1 [shape = 'u32[144,128]{1,0:T(1,128)}', space=vmem, size = 0x12000, scoped, tag = 'internal scratch']
  #allocation2 [shape = 'bf16[32,512]{1,0:T(16,128)(2,1)}', space=vmem, size = 0x8000, scoped, tag = 'scratch operand']
  #allocation3 [shape = 'f32[1]{0:T(128)S(6)}', space=smem, size = 0x200, scoped, tag = 'scoped memory for tpu_custom_call.1']
  %s0 = inlined_call_operand.vmem [shape: f32[2], index: 0, kind: input, shape index: {}]
  %s1 = inlined_call_operand.<no memory space> [shape: f32[1], index: 1, kind: input, shape index: {}]
  %s2 = inlined_call_operand.vmem [shape: bf16[2,4,256], index: 2, kind: input, shape index: {}]
  %s3 = inlined_call_operand.vmem [shape: bf16[2,32,16], index: 3, kind: input, shape index: {}]
  %s4 = inlined_call_operand.vmem [shape: bf16[32,4], index: 4, kind: input, shape index: {}]
  %s5 = inlined_call_operand.vmem [shape: f32[32,1], index: 5, kind: input, shape index: {}]
  %s6 = inlined_call_operand.vmem [shape: bf16[32,32], index: 6, kind: input, shape index: {}]
  %s7 = inlined_call_operand.vmem [shape: bf16[4,32], index: 7, kind: input, shape index: {}]
  %s8 = inlined_call_operand.vmem [shape: f32[4,1], index: 8, kind: input, shape index: {}]
  %s9 = inlined_call_operand.hbm [shape: bf16[2,4,256], index: 9, kind: output, shape index: {}]
  %s10 = sld [smem:[#allocation0]]
  $region73: #{tpu_custom_call.1} parent=0
    _
  %s12 = ssub.s32 1, %s10
  %s13 = scalar_select 0, %s12, %s10
  %14 = sst [smem:[#allocation3]] %s1
  $region1: #{tpu_custom_call.1} parent=0
    #allocation4 [shape = 'u8[512]{0}', space=smem, size = 0x200, scoped, tag = 'input window, operand 0, single buffered']
    #allocation5 [shape = 's32[2]{0}', space=sflag, size = 0x8, scoped, tag = 'scoped memory for tpu_custom_call.1']
    #allocation6 [shape = 's32[2]{0}', space=sflag, size = 0x8, scoped, tag = 'scoped memory for tpu_custom_call.1']
    #allocation7 [shape = 'u8[4096]{0}', space=vmem, size = 0x1000, scoped, tag = 'output window, operand 0']
    %15 = vsyncpa [#allocation6], 0
    %16 = vsyncpa [#allocation5], 0
    %s17 = scalar_lea.sflag [#allocation5], 1
    %18 = vsyncpa %s17, 0
    loop: start=0, step=1, limit=4
    $region2: #{tpu_custom_call.1} parent=1 // loop_pre_header
      _
    $region3: #{tpu_custom_call.1} parent=1 // loop_header
      %s20 = sphi 0, %s24
      %p21 = scmp.ge.s32.totalorder %s20, 4
      %s28 = sphi 0, %s28
      %s30 = sphi 0, %s28
      %s31 = sphi 0, %s30
      %s45 = sphi 0, %s31
      %s49 = sphi 0, %s49
      %s51 = sphi 0, %s49
      %s52 = sphi 0, %s51
      %s66 = sphi 0, %s52
      %s72 = sphi 0, %s74
      %s75 = sphi 0, %s72
      %s76 = sphi 0, %s75
      %s92 = sphi 0, %s76
      %s98 = sphi 0, %s100
      %s101 = sphi 0, %s98
      %s102 = sphi 0, %s101
      %s118 = sphi 0, %s102
      %s122 = sphi 0, %s122
      %s124 = sphi 0, %s122
      %s125 = sphi 0, %s124
      %s139 = sphi 0, %s125
      %s143 = sphi 0, %s143
      %s145 = sphi 0, %s143
      %s146 = sphi 0, %s145
      %s160 = sphi 0, %s146
      %s164 = sphi 0, %s164
      %s166 = sphi 0, %s164
      %s167 = sphi 0, %s166
      %s181 = sphi 0, %s167
      %s185 = sphi 0, %s185
      %s187 = sphi 0, %s185
      %s188 = sphi 0, %s187
      %s202 = sphi 0, %s188
      %s206 = sphi 0, %s206
      %s208 = sphi 0, %s206
      %s209 = sphi 0, %s208
      %s223 = sphi 0, %s209
      %s229 = sphi 0, %s231
      %s232 = sphi 0, %s229
      %s233 = sphi 0, %s232
      %s249 = sphi 0, %s233
    $region4: #{tpu_custom_call.1} parent=1 // loop_header_branch
      %23 = sbr.rel (%p21) target = $region8
    $region5: #{tpu_custom_call.1} parent=1 // loop_body
      %s25 = ssub.s32 %s20, 1
      %s26 = ssub.s32 %s20, 2
      %s27 = sadd.s32 %s20, 1
      %s29 = sadd.s32 %s28, 1
      %p32 = scmp.eq.s32.totalorder %s20, 1
      %p33 = scmp.ne.s32.totalorder %s28, %s30
      %p34 = scmp.eq.s32.totalorder %s20, 0
      %p35 = por %p33, %p34
      %p36 = scmp.ne.s32.totalorder %s28, %s30
      %p37 = scmp.eq.s32.totalorder %s25, 1
      %p38 = por %p36, %p37
      %p39 = scmp.ne.s32.totalorder %s30, %s31
      %p40 = scmp.eq.s32.totalorder %s25, 0
      %p41 = por %p39, %p40
      %p42 = scmp.ne.s32.totalorder %s30, %s31
      %p43 = scmp.eq.s32.totalorder %s26, 1
      %p44 = por %p42, %p43
      %p46 = scmp.ne.s32.totalorder %s31, %s45
      %p47 = scmp.eq.s32.totalorder %s26, 0
      %p48 = por %p46, %p47
      %s50 = sadd.s32 %s49, 1
      %p53 = scmp.eq.s32.totalorder %s20, 1
      %p54 = scmp.ne.s32.totalorder %s49, %s51
      %p55 = scmp.eq.s32.totalorder %s20, 0
      %p56 = por %p54, %p55
      %p57 = scmp.ne.s32.totalorder %s49, %s51
      %p58 = scmp.eq.s32.totalorder %s25, 1
      %p59 = por %p57, %p58
      %p60 = scmp.ne.s32.totalorder %s51, %s52
      %p61 = scmp.eq.s32.totalorder %s25, 0
      %p62 = por %p60, %p61
      %p63 = scmp.ne.s32.totalorder %s51, %s52
      %p64 = scmp.eq.s32.totalorder %s26, 1
      %p65 = por %p63, %p64
      %p67 = scmp.ne.s32.totalorder %s52, %s66
      %p68 = scmp.eq.s32.totalorder %s26, 0
      %p69 = por %p67, %p68
      %s70 = ssub.s32 %s20, %s27
      %p71 = scmp.eq.s32.totalorder %s70, 0
      %s73 = sadd.s32 %s72, 1
      %s74 = scalar_select %p71, %s72, %s73
      %p77 = pneg %p71
      %p78 = scmp.eq.s32.totalorder %s20, 1
      %p79 = por %p77, %p78
      %p80 = scmp.ne.s32.totalorder %s72, %s75
      %p81 = scmp.eq.s32.totalorder %s20, 0
      %p82 = por %p80, %p81
      %p83 = scmp.ne.s32.totalorder %s72, %s75
      %p84 = scmp.eq.s32.totalorder %s25, 1
      %p85 = por %p83, %p84
      %p86 = scmp.ne.s32.totalorder %s75, %s76
      %p87 = scmp.eq.s32.totalorder %s25, 0
      %p88 = por %p86, %p87
      %p89 = scmp.ne.s32.totalorder %s75, %s76
      %p90 = scmp.eq.s32.totalorder %s26, 1
      %p91 = por %p89, %p90
      %p93 = scmp.ne.s32.totalorder %s76, %s92
      %p94 = scmp.eq.s32.totalorder %s26, 0
      %p95 = por %p93, %p94
      %s96 = ssub.s32 %s20, %s27
      %p97 = scmp.eq.s32.totalorder %s96, 0
      %s99 = sadd.s32 %s98, 1
      %s100 = scalar_select %p97, %s98, %s99
      %p103 = pneg %p97
      %p104 = scmp.eq.s32.totalorder %s20, 1
      %p105 = por %p103, %p104
      %p106 = scmp.ne.s32.totalorder %s98, %s101
      %p107 = scmp.eq.s32.totalorder %s20, 0
      %p108 = por %p106, %p107
      %p109 = scmp.ne.s32.totalorder %s98, %s101
      %p110 = scmp.eq.s32.totalorder %s25, 1
      %p111 = por %p109, %p110
      %p112 = scmp.ne.s32.totalorder %s101, %s102
      %p113 = scmp.eq.s32.totalorder %s25, 0
      %p114 = por %p112, %p113
      %p115 = scmp.ne.s32.totalorder %s101, %s102
      %p116 = scmp.eq.s32.totalorder %s26, 1
      %p117 = por %p115, %p116
      %p119 = scmp.ne.s32.totalorder %s102, %s118
      %p120 = scmp.eq.s32.totalorder %s26, 0
      %p121 = por %p119, %p120
      %s123 = sadd.s32 %s122, 1
      %p126 = scmp.eq.s32.totalorder %s20, 1
      %p127 = scmp.ne.s32.totalorder %s122, %s124
      %p128 = scmp.eq.s32.totalorder %s20, 0
      %p129 = por %p127, %p128
      %p130 = scmp.ne.s32.totalorder %s122, %s124
      %p131 = scmp.eq.s32.totalorder %s25, 1
      %p132 = por %p130, %p131
      %p133 = scmp.ne.s32.totalorder %s124, %s125
      %p134 = scmp.eq.s32.totalorder %s25, 0
      %p135 = por %p133, %p134
      %p136 = scmp.ne.s32.totalorder %s124, %s125
      %p137 = scmp.eq.s32.totalorder %s26, 1
      %p138 = por %p136, %p137
      %p140 = scmp.ne.s32.totalorder %s125, %s139
      %p141 = scmp.eq.s32.totalorder %s26, 0
      %p142 = por %p140, %p141
      %s144 = sadd.s32 %s143, 1
      %p147 = scmp.eq.s32.totalorder %s20, 1
      %p148 = scmp.ne.s32.totalorder %s143, %s145
      %p149 = scmp.eq.s32.totalorder %s20, 0
      %p150 = por %p148, %p149
      %p151 = scmp.ne.s32.totalorder %s143, %s145
      %p152 = scmp.eq.s32.totalorder %s25, 1
      %p153 = por %p151, %p152
      %p154 = scmp.ne.s32.totalorder %s145, %s146
      %p155 = scmp.eq.s32.totalorder %s25, 0
      %p156 = por %p154, %p155
      %p157 = scmp.ne.s32.totalorder %s145, %s146
      %p158 = scmp.eq.s32.totalorder %s26, 1
      %p159 = por %p157, %p158
      %p161 = scmp.ne.s32.totalorder %s146, %s160
      %p162 = scmp.eq.s32.totalorder %s26, 0
      %p163 = por %p161, %p162
      %s165 = sadd.s32 %s164, 1
      %p168 = scmp.eq.s32.totalorder %s20, 1
      %p169 = scmp.ne.s32.totalorder %s164, %s166
      %p170 = scmp.eq.s32.totalorder %s20, 0
      %p171 = por %p169, %p170
      %p172 = scmp.ne.s32.totalorder %s164, %s166
      %p173 = scmp.eq.s32.totalorder %s25, 1
      %p174 = por %p172, %p173
      %p175 = scmp.ne.s32.totalorder %s166, %s167
      %p176 = scmp.eq.s32.totalorder %s25, 0
      %p177 = por %p175, %p176
      %p178 = scmp.ne.s32.totalorder %s166, %s167
      %p179 = scmp.eq.s32.totalorder %s26, 1
      %p180 = por %p178, %p179
      %p182 = scmp.ne.s32.totalorder %s167, %s181
      %p183 = scmp.eq.s32.totalorder %s26, 0
      %p184 = por %p182, %p183
      %s186 = sadd.s32 %s185, 1
      %p189 = scmp.eq.s32.totalorder %s20, 1
      %p190 = scmp.ne.s32.totalorder %s185, %s187
      %p191 = scmp.eq.s32.totalorder %s20, 0
      %p192 = por %p190, %p191
      %p193 = scmp.ne.s32.totalorder %s185, %s187
      %p194 = scmp.eq.s32.totalorder %s25, 1
      %p195 = por %p193, %p194
      %p196 = scmp.ne.s32.totalorder %s187, %s188
      %p197 = scmp.eq.s32.totalorder %s25, 0
      %p198 = por %p196, %p197
      %p199 = scmp.ne.s32.totalorder %s187, %s188
      %p200 = scmp.eq.s32.totalorder %s26, 1
      %p201 = por %p199, %p200
      %p203 = scmp.ne.s32.totalorder %s188, %s202
      %p204 = scmp.eq.s32.totalorder %s26, 0
      %p205 = por %p203, %p204
      %s207 = sadd.s32 %s206, 1
      %p210 = scmp.eq.s32.totalorder %s20, 1
      %p211 = scmp.ne.s32.totalorder %s206, %s208
      %p212 = scmp.eq.s32.totalorder %s20, 0
      %p213 = por %p211, %p212
      %p214 = scmp.ne.s32.totalorder %s206, %s208
      %p215 = scmp.eq.s32.totalorder %s25, 1
      %p216 = por %p214, %p215
      %p217 = scmp.ne.s32.totalorder %s208, %s209
      %p218 = scmp.eq.s32.totalorder %s25, 0
      %p219 = por %p217, %p218
      %p220 = scmp.ne.s32.totalorder %s208, %s209
      %p221 = scmp.eq.s32.totalorder %s26, 1
      %p222 = por %p220, %p221
      %p224 = scmp.ne.s32.totalorder %s209, %s223
      %p225 = scmp.eq.s32.totalorder %s26, 0
      %p226 = por %p224, %p225
      %s227 = ssub.s32 %s20, %s27
      %p228 = scmp.eq.s32.totalorder %s227, 0
      %s230 = sadd.s32 %s229, 1
      %s231 = scalar_select %p228, %s229, %s230
      %p234 = pneg %p228
      %p235 = scmp.eq.s32.totalorder %s20, 1
      %p236 = por %p234, %p235
      %p237 = scmp.ne.s32.totalorder %s229, %s232
      %p238 = scmp.eq.s32.totalorder %s20, 0
      %p239 = por %p237, %p238
      %p240 = scmp.ne.s32.totalorder %s229, %s232
      %p241 = scmp.eq.s32.totalorder %s25, 1
      %p242 = por %p240, %p241
      %p243 = scmp.ne.s32.totalorder %s232, %s233
      %p244 = scmp.eq.s32.totalorder %s25, 0
      %p245 = por %p243, %p244
      %p246 = scmp.ne.s32.totalorder %s232, %s233
      %p247 = scmp.eq.s32.totalorder %s26, 1
      %p248 = por %p246, %p247
      %p250 = scmp.ne.s32.totalorder %s233, %s249
      %p251 = scmp.eq.s32.totalorder %s26, 0
      %p252 = por %p250, %p251
      %p253 = scmp.le.s32.totalorder 1, %s20
      %p254 = scmp.lt.s32.totalorder %s20, 3
      %p255 = pnand %p253, %p254
      %p256 = pneg %p255
      // Predicated region
      $region9: #{tpu_custom_call.1} parent=5 // pred_check
        _
      $region10: #{tpu_custom_call.1} parent=5 // pred_check_branch
        %258 = sbr.rel (%p255) target = $region12
      $region11: #{tpu_custom_call.1} parent=5 // pred_region
        %s259 = ssub.s32 %s20, 1
        // Predicated region
        $region13: #{tpu_custom_call.1} parent=11 // pred_check
          %p260 = pneg %p41
        $region14: #{tpu_custom_call.1} parent=11 // pred_check_branch
          %262 = sbr.rel (%p260) target = $region16
        $region15: #{tpu_custom_call.1} parent=11 // pred_region
          %s264 = ssub.s32 16, 16
          %265 = vsyncadd [#allocation6], %s264
          %s267 = sshll.u32 %s0, 4
          %s268 = int_to_ptr.vmem [resolvable:$true] %s267
          %270 = dma.vmem_to_smem %s268, 16, [#allocation4], [#allocation6]
        $region16: #{tpu_custom_call.1} parent=11 // pred_fallthru
          _
        // Predicated region
        $region17: #{tpu_custom_call.1} parent=11 // pred_check
          %p271 = pneg %p62
        $region18: #{tpu_custom_call.1} parent=11 // pred_check_branch
          %273 = sbr.rel (%p271) target = $region20
        $region19: #{tpu_custom_call.1} parent=11 // pred_region
          _
        $region20: #{tpu_custom_call.1} parent=11 // pred_fallthru
          _
        // Predicated region
        $region21: #{tpu_custom_call.1} parent=11 // pred_check
          %p274 = pneg %p135
        $region22: #{tpu_custom_call.1} parent=11 // pred_check_branch
          %276 = sbr.rel (%p274) target = $region24
        $region23: #{tpu_custom_call.1} parent=11 // pred_region
          _
        $region24: #{tpu_custom_call.1} parent=11 // pred_fallthru
          _
        // Predicated region
        $region25: #{tpu_custom_call.1} parent=11 // pred_check
          %p277 = pneg %p156
        $region26: #{tpu_custom_call.1} parent=11 // pred_check_branch
          %279 = sbr.rel (%p277) target = $region28
        $region27: #{tpu_custom_call.1} parent=11 // pred_region
          _
        $region28: #{tpu_custom_call.1} parent=11 // pred_fallthru
          _
        // Predicated region
        $region29: #{tpu_custom_call.1} parent=11 // pred_check
          %p280 = pneg %p177
        $region30: #{tpu_custom_call.1} parent=11 // pred_check_branch
          %282 = sbr.rel (%p280) target = $region32
        $region31: #{tpu_custom_call.1} parent=11 // pred_region
          _
        $region32: #{tpu_custom_call.1} parent=11 // pred_fallthru
          _
        // Predicated region
        $region33: #{tpu_custom_call.1} parent=11 // pred_check
          %p283 = pneg %p198
        $region34: #{tpu_custom_call.1} parent=11 // pred_check_branch
          %285 = sbr.rel (%p283) target = $region36
        $region35: #{tpu_custom_call.1} parent=11 // pred_region
          _
        $region36: #{tpu_custom_call.1} parent=11 // pred_fallthru
          _
        // Predicated region
        $region37: #{tpu_custom_call.1} parent=11 // pred_check
          %p286 = pneg %p219
        $region38: #{tpu_custom_call.1} parent=11 // pred_check_branch
          %288 = sbr.rel (%p286) target = $region40
        $region39: #{tpu_custom_call.1} parent=11 // pred_region
          _
        $region40: #{tpu_custom_call.1} parent=11 // pred_fallthru
          _
      $region12: #{tpu_custom_call.1} parent=5 // pred_fallthru
        _
      %p289 = scmp.lt.s32.totalorder %s20, 2
      // Predicated region
      $region41: #{tpu_custom_call.1} parent=5 // pred_check
        %p290 = pneg %p289
      $region42: #{tpu_custom_call.1} parent=5 // pred_check_branch
        %292 = sbr.rel (%p290) target = $region44
      $region43: #{tpu_custom_call.1} parent=5 // pred_region
        // Predicated region
        $region45: #{tpu_custom_call.1} parent=43 // pred_check
          %p293 = pneg %p82
        $region46: #{tpu_custom_call.1} parent=43 // pred_check_branch
          %295 = sbr.rel (%p293) target = $region48
        $region47: #{tpu_custom_call.1} parent=43 // pred_region
          %p296 = scmp.lt.s32.totalorder %s20, 1
          %s297 = scalar_select %p296, %s20, 1
          %s298 = smul.addr %s297, 2
          %s299 = smul.addr %s298, 2
          %s300 = scalar_lea.vmem %s2, %s299
        $region48: #{tpu_custom_call.1} parent=43 // pred_fallthru
          _
        // Predicated region
        $region49: #{tpu_custom_call.1} parent=43 // pred_check
          %p301 = pneg %p108
        $region50: #{tpu_custom_call.1} parent=43 // pred_check_branch
          %303 = sbr.rel (%p301) target = $region52
        $region51: #{tpu_custom_call.1} parent=43 // pred_region
          %p304 = scmp.lt.s32.totalorder %s20, 1
          %s305 = scalar_select %p304, %s20, 1
          %s306 = smul.addr %s305, 4
          %s307 = smul.addr %s306, 4
          %s308 = scalar_lea.vmem %s3, %s307
        $region52: #{tpu_custom_call.1} parent=43 // pred_fallthru
          _
      $region44: #{tpu_custom_call.1} parent=5 // pred_fallthru
        _
      %p309 = scmp.le.s32.totalorder 1, %s20
      %p310 = scmp.lt.s32.totalorder %s20, 3
      %p311 = pnand %p309, %p310
      %p312 = pneg %p311
      // Predicated region
      $region53: #{tpu_custom_call.1} parent=5 // pred_check
        _
      $region54: #{tpu_custom_call.1} parent=5 // pred_check_branch
        %314 = sbr.rel (%p311) target = $region56
      $region55: #{tpu_custom_call.1} parent=5 // pred_region
        %s315 = ssub.s32 %s20, 1
        // Predicated region
        $region57: #{tpu_custom_call.1} parent=55 // pred_check
          %p316 = pneg %p41
        $region58: #{tpu_custom_call.1} parent=55 // pred_check_branch
          %318 = sbr.rel (%p316) target = $region60
        $region59: #{tpu_custom_call.1} parent=55 // pred_region
          %319 = dma.done [#allocation6], 16
        $region60: #{tpu_custom_call.1} parent=55 // pred_fallthru
          _
        %320 = sfence
        %p321 = pneg %p41
        %p322 = pneg %p38
        %p323 = pneg %p62
        %p324 = pneg %p59
        %p325 = scmp.lt.s32.totalorder %s25, 1
        %s326 = scalar_select %p325, %s25, 1
        %s327 = smul.addr %s326, 2
        %s328 = smul.addr %s327, 2
        %s329 = scalar_lea.vmem %s2, %s328
        %p330 = pneg %p88
        %p331 = pneg %p85
        %p332 = scmp.lt.s32.totalorder %s25, 1
        %s333 = scalar_select %p332, %s25, 1
        %s334 = smul.addr %s333, 4
        %s335 = smul.addr %s334, 4
        %s336 = scalar_lea.vmem %s3, %s335
        %p337 = pneg %p114
        %p338 = pneg %p111
        %p339 = pneg %p135
        %p340 = pneg %p132
        %p341 = pneg %p156
        %p342 = pneg %p153
        %p343 = pneg %p177
        %p344 = pneg %p174
        %p345 = pneg %p198
        %p346 = pneg %p195
        %p347 = pneg %p219
        %p348 = pneg %p216
        %p349 = pneg %p245
        %p350 = pneg %p242
        %s351 = sand.u32 %s232, 1
        %s352 = scalar_lea.sflag [#allocation5], %s351
        %s353 = sand.u32 %s232, 1
        %s354 = smul.addr %s353, 4
        %s355 = scalar_lea.vmem [#allocation7], %s354
        %p356 = scmp.lt.s32.totalorder %s25, 1
        %s357 = scalar_select %p356, %s25, 1
        %s358 = smul.addr %s357, 2
        %s359 = smul.addr %s358, 2
        %s360 = scalar_lea.vmem %s2, %s359
        %p361 = scmp.lt.s32.totalorder %s25, 1
        %s362 = scalar_select %p361, %s25, 1
        %s363 = smul.addr %s362, 4
        %s364 = smul.addr %s363, 4
        %s365 = scalar_lea.vmem %s3, %s364
        %s367 = sld [smem:[#allocation3]]
        %s368 = sld [smem:[#allocation4 + %s25]]
        %s369 = smul.f32 %s368, %s368
        %s370 = sadd.f32 %s369, 1.0
        %v371 = vstv %s370
        %v372 = vrsqrt.pop %v371
        %v373 = vmul.f32 %v371, %v372
        %vm374 = vcmp.eq.f32.partialorder %v371, inf
        %v375 = vsel %vm374, %v371, %v373
        %vm376 = vcmp.eq.f32.partialorder %v371, 0.0
        %v377 = vand.u32 %v371, 2147483648
        %v378 = vsel %vm376, %v377, %v375
        %s379 = vtos %v378
        %v380 = vstv %s379
        %v381 = vrcp.pop %v380
        %s382 = vtos %v381
        %v383 = vld [vmem:[%s360] sm:$0xf]
        %v384 = vunpack.c.l.bf16 %v383
        %v385 = vstv %s382
        %v386 = vmul.f32 %v385, %v384
        %v388 = vcombine.high %v386, %v386
        %v390 = vpack.c.bf16 %v386, %v386
        %v391 = vpack.c.bf16 %v388, %v388
        %v392 = vld [vmem:[%s4] sm:$0xf]
        %v393 = vld [vmem:[%s4 + $0x4] sm:$0xf]
        %v394 = vld [vmem:[%s4 + $0x8] sm:$0xf]
        %v395 = vld [vmem:[%s4 + $0xc] sm:$0xf]
        %v396 = vld [vmem:[%s5] sm:$0xff]
        %v397 = vld [vmem:[%s5 + $0x8] sm:$0xff]
        %v398 = vld [vmem:[%s5 + $0x10] sm:$0xff]
        %v399 = vld [vmem:[%s5 + $0x18] sm:$0xff]
        %401 = vset.pattern.permute.xlu0 0
        %402 = vperm.xlu0 %401, %v396
        %v403 = vpop.permute.xlu0 %402
        %406 = vset.pattern.permute.xlu0 0
        %407 = vperm.xlu0 %406, %v397
        %v408 = vpop.permute.xlu0 %407
        %411 = vset.pattern.permute.xlu0 0
        %412 = vperm.xlu0 %411, %v398
        %v413 = vpop.permute.xlu0 %412
        %416 = vset.pattern.permute.xlu0 0
        %417 = vperm.xlu0 %416, %v399
        %v418 = vpop.permute.xlu0 %417
        %v424 = vunpack.c.l.b16 %v392
        %v425 = vunpack.c.l.b16 %v393
        %v426 = vunpack.c.l.b16 %v394
        %v427 = vunpack.c.l.b16 %v395
        %v428 = vpack.c.b16 %v425, %v424
        %v429 = vpack.c.b16 %v427, %v426
        %vm430 = vcmask 31744
        %v432 = vsel %vm430, %v428, 0
        %v435 = vsel %vm430, %v429, 0
        %vm437 = vcmask 1041408
        %v439 = vsel %vm437, %v390, 0
        %v442 = vsel %vm437, %v391, 0
        %444 = vmatprep.subr.bf16.mxu0 %v442
        %445 = vmatpush1.bf16.msra.mxu0 %v439
        %446 = vmatprep.subr.bf16.mxu0 0
        %447 = vmatpush1.bf16.msra.mxu0 0
        %448 = vmatprep.subr.bf16.mxu0 0
        %449 = vmatpush1.bf16.msra.mxu0 0
        %450 = vmatprep.subr.bf16.mxu0 0
        %451 = vmatpush1.bf16.msra.mxu0 0
        %452 = vmatprep.subr.bf16.mxu0 0
        %453 = vmatpush1.bf16.msra.mxu0 0
        %454 = vmatprep.subr.bf16.mxu0 0
        %455 = vmatpush1.bf16.msra.mxu0 0
        %456 = vmatprep.subr.bf16.mxu0 0
        %457 = vmatpush1.bf16.msra.mxu0 0
        %458 = vmatprep.subr.bf16.mxu0 0
        %459 = vmatpush1.bf16.msra.mxu0 0
        %460 = vmatprep.subr.bf16.mxu0 0
        %461 = vmatpush1.bf16.msra.mxu0 0
        %462 = vmatprep.subr.bf16.mxu0 0
        %463 = vmatpush1.bf16.msra.mxu0 0
        %464 = vmatprep.subr.bf16.mxu0 0
        %465 = vmatpush1.bf16.msra.mxu0 0
        %466 = vmatprep.subr.bf16.mxu0 0
        %467 = vmatpush1.bf16.msra.mxu0 0
        %468 = vmatprep.subr.bf16.mxu0 0
        %469 = vmatpush1.bf16.msra.mxu0 0
        %470 = vmatprep.subr.bf16.mxu0 0
        %471 = vmatpush1.bf16.msra.mxu0 0
        %472 = vmatprep.subr.bf16.mxu0 0
        %473 = vmatpush1.bf16.msra.mxu0 0
        %474 = vmatprep.subr.bf16.mxu0 0
        %475 = vmatpush1.bf16.msra.mxu0 0
        %476 = vmatprep.mubr.bf16.mxu0 0
        %477 = vmatmul.mubr.bf16.gmra.mrb[0].mxu0 %v432
        %v478 = vpop.f32.mrb[0].mxu0
        %v479 = vadd.f32 %v403, %v478
        %v480 = vpop.f32.mrb[0].mxu0
        %v481 = vadd.f32 %v403, %v480
        %v482 = vpop.f32.mrb[0].mxu0
        %v483 = vadd.f32 %v408, %v482
        %v484 = vpop.f32.mrb[0].mxu0
        %v485 = vadd.f32 %v408, %v484
        %486 = vmatprep.mubr.bf16.mxu0 0
        %487 = vmatmul.mubr.bf16.gmra.mrb[0].mxu0 %v435
        %v488 = vpop.f32.mrb[0].mxu0
        %v489 = vadd.f32 %v413, %v488
        %v490 = vpop.f32.mrb[0].mxu0
        %v491 = vadd.f32 %v413, %v490
        %v492 = vpop.f32.mrb[0].mxu0
        %v493 = vadd.f32 %v418, %v492
        %v494 = vpop.f32.mrb[0].mxu0
        %v495 = vadd.f32 %v418, %v494
        %496 = vdwg.mxu0
        %v497 = vld [vmem:[%s6] sm:$0xf]
        %v498 = vld [vmem:[%s6 + $0x4] sm:$0xf]
        %v499 = vld [vmem:[%s6 + $0x8] sm:$0xf]
        %v500 = vld [vmem:[%s6 + $0xc] sm:$0xf]
        %v501 = vld [vmem:[%s365] sm:$0xf]
        %v502 = vld [vmem:[%s365 + $0x4] sm:$0xf]
        %v503 = vld [vmem:[%s365 + $0x8] sm:$0xf]
        %v504 = vld [vmem:[%s365 + $0xc] sm:$0xf]
        %v509 = vunpack.c.l.b16 %v497
        %v510 = vunpack.c.l.b16 %v498
        %v511 = vunpack.c.l.b16 %v499
        %v512 = vunpack.c.l.b16 %v500
        %v513 = vpack.c.b16 %v510, %v509
        %v514 = vpack.c.b16 %v512, %v511
        %v519 = vunpack.c.l.b16 %v501
        %v520 = vunpack.c.l.b16 %v502
        %v521 = vunpack.c.l.b16 %v503
        %v522 = vunpack.c.l.b16 %v504
        %v523 = vpack.c.b16 %v520, %v519
        %v524 = vpack.c.b16 %v522, %v521
        %vm527 = vcmask 261120
        %v529 = vsel %vm527, %v513, 0
        %v532 = vsel %vm527, %v514, 0
        %534 = vmatprep.subr.bf16.mxu0 0
        %535 = vmatpush1.bf16.msra.mxu0 %v523
        %536 = vmatprep.subr.bf16.mxu0 0
        %537 = vmatpush1.bf16.msra.mxu0 %v524
        %538 = vmatprep.subr.bf16.mxu0 0
        %539 = vmatpush1.bf16.msra.mxu0 0
        %540 = vmatprep.subr.bf16.mxu0 0
        %541 = vmatpush1.bf16.msra.mxu0 0
        %542 = vmatprep.subr.bf16.mxu0 0
        %543 = vmatpush1.bf16.msra.mxu0 0
        %544 = vmatprep.subr.bf16.mxu0 0
        %545 = vmatpush1.bf16.msra.mxu0 0
        %546 = vmatprep.subr.bf16.mxu0 0
        %547 = vmatpush1.bf16.msra.mxu0 0
        %548 = vmatprep.subr.bf16.mxu0 0
        %549 = vmatpush1.bf16.msra.mxu0 0
        %550 = vmatprep.subr.bf16.mxu0 0
        %551 = vmatpush1.bf16.msra.mxu0 0
        %552 = vmatprep.subr.bf16.mxu0 0
        %553 = vmatpush1.bf16.msra.mxu0 0
        %554 = vmatprep.subr.bf16.mxu0 0
        %555 = vmatpush1.bf16.msra.mxu0 0
        %556 = vmatprep.subr.bf16.mxu0 0
        %557 = vmatpush1.bf16.msra.mxu0 0
        %558 = vmatprep.subr.bf16.mxu0 0
        %559 = vmatpush1.bf16.msra.mxu0 0
        %560 = vmatprep.subr.bf16.mxu0 0
        %561 = vmatpush1.bf16.msra.mxu0 0
        %562 = vmatprep.subr.bf16.mxu0 0
        %563 = vmatpush1.bf16.msra.mxu0 0
        %564 = vmatprep.subr.bf16.mxu0 0
        %565 = vmatpush1.bf16.msra.mxu0 0
        %566 = vmatprep.mubr.bf16.mxu0 0
        %567 = vmatmul.mubr.bf16.gmra.mrb[0].mxu0 %v529
        %v568 = vpop.f32.mrb[0].mxu0
        %v569 = vadd.f32 0.0, %v568
        %v570 = vpop.f32.mrb[0].mxu0
        %v571 = vpop.f32.mrb[0].mxu0
        %v572 = vadd.f32 0.0, %v571
        %v573 = vpop.f32.mrb[0].mxu0
        %574 = vmatprep.mubr.bf16.mxu0 0
        %575 = vmatmul.mubr.bf16.gmra.mrb[0].mxu0 %v532
        %v576 = vpop.f32.mrb[0].mxu0
        %v577 = vadd.f32 0.0, %v576
        %v578 = vpop.f32.mrb[0].mxu0
        %v579 = vpop.f32.mrb[0].mxu0
        %v580 = vadd.f32 0.0, %v579
        %v581 = vpop.f32.mrb[0].mxu0
        %582 = vdwg.mxu0
        %vm583 = vcmask 64512
        %v584 = vsel %vm583, %v569, 0.0
        %585 = vadd.xlane.f32.xlu0 %v584
        %v586 = vpop.xlane.xlu0 %585
        %v587 = vsel %vm583, %v572, 0.0
        %588 = vadd.xlane.f32.xlu0 %v587
        %v589 = vpop.xlane.xlu0 %588
        %v590 = vsel %vm583, %v577, 0.0
        %591 = vadd.xlane.f32.xlu0 %v590
        %v592 = vpop.xlane.xlu0 %591
        %v593 = vsel %vm583, %v580, 0.0
        %594 = vadd.xlane.f32.xlu0 %v593
        %v595 = vpop.xlane.xlu0 %594
        %v596 = vrcp.pop 8.0
        %v597 = vmul.f32 %v586, %v596
        %v598 = vmul.f32 %v589, %v596
        %v599 = vmul.f32 %v592, %v596
        %v600 = vmul.f32 %v595, %v596
        %605 = vrot.lane.b32.xlu0 %v569, 120
        %v606 = vpop.permute.xlu0 %605
        %607 = vrot.lane.b32.xlu0 %v572, 120
        %v608 = vpop.permute.xlu0 %607
        %609 = vrot.lane.b32.xlu0 %v577, 120
        %v610 = vpop.permute.xlu0 %609
        %611 = vrot.lane.b32.xlu0 %v580, 120
        %v612 = vpop.permute.xlu0 %611
        %v617 = vsel %vm583, %v606, 0.0
        %618 = vadd.xlane.f32.xlu0 %v617
        %v619 = vpop.xlane.xlu0 %618
        %v620 = vsel %vm583, %v608, 0.0
        %621 = vadd.xlane.f32.xlu0 %v620
        %v622 = vpop.xlane.xlu0 %621
        %v623 = vsel %vm583, %v610, 0.0
        %624 = vadd.xlane.f32.xlu0 %v623
        %v625 = vpop.xlane.xlu0 %624
        %v626 = vsel %vm583, %v612, 0.0
        %627 = vadd.xlane.f32.xlu0 %v626
        %v628 = vpop.xlane.xlu0 %627
        %v629 = vmul.f32 %v619, %v596
        %v630 = vmul.f32 %v622, %v596
        %v631 = vmul.f32 %v625, %v596
        %v632 = vmul.f32 %v628, %v596
        %v633 = vadd.f32 %v479, %v597
        %v634 = vadd.f32 %v481, %v597
        %v635 = vadd.f32 %v483, %v598
        %v636 = vadd.f32 %v485, %v598
        %v637 = vadd.f32 %v489, %v599
        %v638 = vadd.f32 %v491, %v599
        %v639 = vadd.f32 %v493, %v600
        %v640 = vadd.f32 %v495, %v600
        %v641 = vmul.f32 %v633, %v633
        %v642 = vmul.f32 %v634, %v634
        %v643 = vmul.f32 %v635, %v635
        %v644 = vmul.f32 %v636, %v636
        %v645 = vmul.f32 %v637, %v637
        %v646 = vmul.f32 %v638, %v638
        %v647 = vmul.f32 %v639, %v639
        %v648 = vmul.f32 %v640, %v640
        %v649 = vmul.f32 %v633, %v641
        %v650 = vmul.f32 %v634, %v642
        %v651 = vmul.f32 %v635, %v643
        %v652 = vmul.f32 %v636, %v644
        %v653 = vmul.f32 %v637, %v645
        %v654 = vmul.f32 %v638, %v646
        %v655 = vmul.f32 %v639, %v647
        %v656 = vmul.f32 %v640, %v648
        %v657 = vmul.f32 %v649, 0.044715
        %v658 = vmul.f32 %v650, 0.044715
        %v659 = vmul.f32 %v651, 0.044715
        %v660 = vmul.f32 %v652, 0.044715
        %v661 = vmul.f32 %v653, 0.044715
        %v662 = vmul.f32 %v654, 0.044715
        %v663 = vmul.f32 %v655, 0.044715
        %v664 = vmul.f32 %v656, 0.044715
        %v665 = vadd.f32 %v633, %v657
        %v666 = vadd.f32 %v634, %v658
        %v667 = vadd.f32 %v635, %v659
        %v668 = vadd.f32 %v636, %v660
        %v669 = vadd.f32 %v637, %v661
        %v670 = vadd.f32 %v638, %v662
        %v671 = vadd.f32 %v639, %v663
        %v672 = vadd.f32 %v640, %v664
        %v673 = vmul.f32 %v665, 0.7978846
        %v674 = vmul.f32 %v666, 0.7978846
        %v675 = vmul.f32 %v667, 0.7978846
        %v676 = vmul.f32 %v668, 0.7978846
        %v677 = vmul.f32 %v669, 0.7978846
        %v678 = vmul.f32 %v670, 0.7978846
        %v679 = vmul.f32 %v671, 0.7978846
        %v680 = vmul.f32 %v672, 0.7978846
        %v681 = vtanh.pop %v673
        %v682 = vtanh.pop %v674
        %v683 = vtanh.pop %v675
        %v684 = vtanh.pop %v676
        %v685 = vtanh.pop %v677
        %v686 = vtanh.pop %v678
        %v687 = vtanh.pop %v679
        %v688 = vtanh.pop %v680
        %v689 = vadd.f32 %v681, 1.0
        %v690 = vadd.f32 %v682, 1.0
        %v691 = vadd.f32 %v683, 1.0
        %v692 = vadd.f32 %v684, 1.0
        %v693 = vadd.f32 %v685, 1.0
        %v694 = vadd.f32 %v686, 1.0
        %v695 = vadd.f32 %v687, 1.0
        %v696 = vadd.f32 %v688, 1.0
        %v697 = vmul.f32 %v689, 0.5
        %v698 = vmul.f32 %v690, 0.5
        %v699 = vmul.f32 %v691, 0.5
        %v700 = vmul.f32 %v692, 0.5
        %v701 = vmul.f32 %v693, 0.5
        %v702 = vmul.f32 %v694, 0.5
        %v703 = vmul.f32 %v695, 0.5
        %v704 = vmul.f32 %v696, 0.5
        %v705 = vmul.f32 %v633, %v697
        %v706 = vmul.f32 %v634, %v698
        %v707 = vmul.f32 %v635, %v699
        %v708 = vmul.f32 %v636, %v700
        %v709 = vmul.f32 %v637, %v701
        %v710 = vmul.f32 %v638, %v702
        %v711 = vmul.f32 %v639, %v703
        %v712 = vmul.f32 %v640, %v704
        %v713 = vadd.f32 %v479, %v629
        %v714 = vadd.f32 %v481, %v629
        %v715 = vadd.f32 %v483, %v630
        %v716 = vadd.f32 %v485, %v630
        %v717 = vadd.f32 %v489, %v631
        %v718 = vadd.f32 %v491, %v631
        %v719 = vadd.f32 %v493, %v632
        %v720 = vadd.f32 %v495, %v632
        %v721 = vmul.f32 %v713, %v713
        %v722 = vmul.f32 %v714, %v714
        %v723 = vmul.f32 %v715, %v715
        %v724 = vmul.f32 %v716, %v716
        %v725 = vmul.f32 %v717, %v717
        %v726 = vmul.f32 %v718, %v718
        %v727 = vmul.f32 %v719, %v719
        %v728 = vmul.f32 %v720, %v720
        %v729 = vmul.f32 %v713, %v721
        %v730 = vmul.f32 %v714, %v722
        %v731 = vmul.f32 %v715, %v723
        %v732 = vmul.f32 %v716, %v724
        %v733 = vmul.f32 %v717, %v725
        %v734 = vmul.f32 %v718, %v726
        %v735 = vmul.f32 %v719, %v727
        %v736 = vmul.f32 %v720, %v728
        %v737 = vmul.f32 %v729, 0.044715
        %v738 = vmul.f32 %v730, 0.044715
        %v739 = vmul.f32 %v731, 0.044715
        %v740 = vmul.f32 %v732, 0.044715
        %v741 = vmul.f32 %v733, 0.044715
        %v742 = vmul.f32 %v734, 0.044715
        %v743 = vmul.f32 %v735, 0.044715
        %v744 = vmul.f32 %v736, 0.044715
        %v745 = vadd.f32 %v713, %v737
        %v746 = vadd.f32 %v714, %v738
        %v747 = vadd.f32 %v715, %v739
        %v748 = vadd.f32 %v716, %v740
        %v749 = vadd.f32 %v717, %v741
        %v750 = vadd.f32 %v718, %v742
        %v751 = vadd.f32 %v719, %v743
        %v752 = vadd.f32 %v720, %v744
        %v753 = vmul.f32 %v745, 0.7978846
        %v754 = vmul.f32 %v746, 0.7978846
        %v755 = vmul.f32 %v747, 0.7978846
        %v756 = vmul.f32 %v748, 0.7978846
        %v757 = vmul.f32 %v749, 0.7978846
        %v758 = vmul.f32 %v750, 0.7978846
        %v759 = vmul.f32 %v751, 0.7978846
        %v760 = vmul.f32 %v752, 0.7978846
        %v761 = vtanh.pop %v753
        %v762 = vtanh.pop %v754
        %v763 = vtanh.pop %v755
        %v764 = vtanh.pop %v756
        %v765 = vtanh.pop %v757
        %v766 = vtanh.pop %v758
        %v767 = vtanh.pop %v759
        %v768 = vtanh.pop %v760
        %v769 = vadd.f32 %v761, 1.0
        %v770 = vadd.f32 %v762, 1.0
        %v771 = vadd.f32 %v763, 1.0
        %v772 = vadd.f32 %v764, 1.0
        %v773 = vadd.f32 %v765, 1.0
        %v774 = vadd.f32 %v766, 1.0
        %v775 = vadd.f32 %v767, 1.0
        %v776 = vadd.f32 %v768, 1.0
        %v777 = vmul.f32 %v769, 0.5
        %v778 = vmul.f32 %v770, 0.5
        %v779 = vmul.f32 %v771, 0.5
        %v780 = vmul.f32 %v772, 0.5
        %v781 = vmul.f32 %v773, 0.5
        %v782 = vmul.f32 %v774, 0.5
        %v783 = vmul.f32 %v775, 0.5
        %v784 = vmul.f32 %v776, 0.5
        %v785 = vmul.f32 %v713, %v777
        %v786 = vmul.f32 %v714, %v778
        %v787 = vmul.f32 %v715, %v779
        %v788 = vmul.f32 %v716, %v780
        %v789 = vmul.f32 %v717, %v781
        %v790 = vmul.f32 %v718, %v782
        %v791 = vmul.f32 %v719, %v783
        %v792 = vmul.f32 %v720, %v784
        %v793 = vpack.c.bf16 %v707, %v705
        %v794 = vpack.c.bf16 %v708, %v706
        %v795 = vpack.c.bf16 %v711, %v709
        %v796 = vpack.c.bf16 %v712, %v710
        %797 = vst [vmem:[#allocation2] sm:$0xff] %v793
        %798 = vst [vmem:[#allocation2 + $0x8] sm:$0xff] %v794
        %799 = vst [vmem:[#allocation2 + $0x20] sm:$0xff] %v795
        %800 = vst [vmem:[#allocation2 + $0x28] sm:$0xff] %v796
        %v801 = vpack.c.bf16 %v787, %v785
        %v802 = vpack.c.bf16 %v788, %v786
        %v803 = vpack.c.bf16 %v791, %v789
        %v804 = vpack.c.bf16 %v792, %v790
        %805 = vst [vmem:[#allocation2 + $0x10] sm:$0xff] %v801
        %806 = vst [vmem:[#allocation2 + $0x18] sm:$0xff] %v802
        %807 = vst [vmem:[#allocation2 + $0x30] sm:$0xff] %v803
        %808 = vst [vmem:[#allocation2 + $0x38] sm:$0xff] %v804
        %v809 = vld [vmem:[%s7] sm:$0x3]
        %v810 = vld [vmem:[#allocation2] sm:$0xff]
        %v811 = vld [vmem:[#allocation2 + $0x8] sm:$0xff]
        %v812 = vld [vmem:[#allocation2 + $0x10] sm:$0xff]
        %v813 = vld [vmem:[#allocation2 + $0x18] sm:$0xff]
        %v814 = vld [vmem:[#allocation2 + $0x20] sm:$0xff]
        %v815 = vld [vmem:[#allocation2 + $0x28] sm:$0xff]
        %v816 = vld [vmem:[#allocation2 + $0x30] sm:$0xff]
        %v817 = vld [vmem:[#allocation2 + $0x38] sm:$0xff]
        %v819 = vsel %vm527, %v809, 0
        %821 = vmatprep.subr.bf16.mxu0 %v811
        %822 = vmatpush1.bf16.msra.mxu0 %v810
        %823 = vmatprep.subr.bf16.mxu0 %v815
        %824 = vmatpush1.bf16.msra.mxu0 %v814
        %825 = vmatprep.subr.bf16.mxu0 0
        %826 = vmatpush1.bf16.msra.mxu0 0
        %827 = vmatprep.subr.bf16.mxu0 0
        %828 = vmatpush1.bf16.msra.mxu0 0
        %829 = vmatprep.subr.bf16.mxu0 0
        %830 = vmatpush1.bf16.msra.mxu0 0
        %831 = vmatprep.subr.bf16.mxu0 0
        %832 = vmatpush1.bf16.msra.mxu0 0
        %833 = vmatprep.subr.bf16.mxu0 0
        %834 = vmatpush1.bf16.msra.mxu0 0
        %835 = vmatprep.subr.bf16.mxu0 0
        %836 = vmatpush1.bf16.msra.mxu0 0
        %837 = vmatprep.subr.bf16.mxu0 0
        %838 = vmatpush1.bf16.msra.mxu0 0
        %839 = vmatprep.subr.bf16.mxu0 0
        %840 = vmatpush1.bf16.msra.mxu0 0
        %841 = vmatprep.subr.bf16.mxu0 0
        %842 = vmatpush1.bf16.msra.mxu0 0
        %843 = vmatprep.subr.bf16.mxu0 0
        %844 = vmatpush1.bf16.msra.mxu0 0
        %845 = vmatprep.subr.bf16.mxu0 0
        %846 = vmatpush1.bf16.msra.mxu0 0
        %847 = vmatprep.subr.bf16.mxu0 0
        %848 = vmatpush1.bf16.msra.mxu0 0
        %849 = vmatprep.subr.bf16.mxu0 0
        %850 = vmatpush1.bf16.msra.mxu0 0
        %851 = vmatprep.subr.bf16.mxu0 0
        %852 = vmatpush1.bf16.msra.mxu0 0
        %853 = vmatprep.mubr.bf16.mxu0 0
        %854 = vmatmul.mubr.bf16.gmra.mrb[0].mxu0 %v819
        %v855 = vpop.f32.mrb[0].mxu0
        %v856 = vadd.f32 0.0, %v855
        %v857 = vpop.f32.mrb[0].mxu0
        %v858 = vadd.f32 0.0, %v857
        %v859 = vpop.f32.mrb[0].mxu0
        %v860 = vpop.f32.mrb[0].mxu0
        %861 = vdwg.mxu0
        %862 = vmatprep.subr.bf16.mxu0 %v813
        %863 = vmatpush1.bf16.msra.mxu0 %v812
        %864 = vmatprep.subr.bf16.mxu0 %v817
        %865 = vmatpush1.bf16.msra.mxu0 %v816
        %866 = vmatprep.subr.bf16.mxu0 0
        %867 = vmatpush1.bf16.msra.mxu0 0
        %868 = vmatprep.subr.bf16.mxu0 0
        %869 = vmatpush1.bf16.msra.mxu0 0
        %870 = vmatprep.subr.bf16.mxu0 0
        %871 = vmatpush1.bf16.msra.mxu0 0
        %872 = vmatprep.subr.bf16.mxu0 0
        %873 = vmatpush1.bf16.msra.mxu0 0
        %874 = vmatprep.subr.bf16.mxu0 0
        %875 = vmatpush1.bf16.msra.mxu0 0
        %876 = vmatprep.subr.bf16.mxu0 0
        %877 = vmatpush1.bf16.msra.mxu0 0
        %878 = vmatprep.subr.bf16.mxu0 0
        %879 = vmatpush1.bf16.msra.mxu0 0
        %880 = vmatprep.subr.bf16.mxu0 0
        %881 = vmatpush1.bf16.msra.mxu0 0
        %882 = vmatprep.subr.bf16.mxu0 0
        %883 = vmatpush1.bf16.msra.mxu0 0
        %884 = vmatprep.subr.bf16.mxu0 0
        %885 = vmatpush1.bf16.msra.mxu0 0
        %886 = vmatprep.subr.bf16.mxu0 0
        %887 = vmatpush1.bf16.msra.mxu0 0
        %888 = vmatprep.subr.bf16.mxu0 0
        %889 = vmatpush1.bf16.msra.mxu0 0
        %890 = vmatprep.subr.bf16.mxu0 0
        %891 = vmatpush1.bf16.msra.mxu0 0
        %892 = vmatprep.subr.bf16.mxu0 0
        %893 = vmatpush1.bf16.msra.mxu0 0
        %894 = vmatprep.mubr.bf16.mxu0 0
        %895 = vmatmul.mubr.bf16.gmra.mrb[0].mxu0 %v819
        %v896 = vpop.f32.mrb[0].mxu0
        %v897 = vadd.f32 0.0, %v896
        %v898 = vpop.f32.mrb[0].mxu0
        %v899 = vadd.f32 0.0, %v898
        %v900 = vpop.f32.mrb[0].mxu0
        %v901 = vpop.f32.mrb[0].mxu0
        %902 = vdwg.mxu0
        %v903 = vsub.f32 %v897, %v856
        %v904 = vsub.f32 %v899, %v858
        %v905 = vstv %s367
        %v906 = vmul.f32 %v905, %v903
        %v907 = vmul.f32 %v905, %v904
        %v908 = vadd.f32 %v856, %v906
        %v909 = vadd.f32 %v858, %v907
        %v910 = vld [vmem:[%s8] sm:$0xf]
        %912 = vset.pattern.permute.xlu0 0
        %913 = vperm.xlu0 %912, %v910
        %v914 = vpop.permute.xlu0 %913
        %v916 = vadd.f32 %v908, %v914
        %v917 = vadd.f32 %v909, %v914
        %v918 = vstv %s368
        %v919 = vmul.f32 %v918, %v916
        %v920 = vmul.f32 %v918, %v917
        %v923 = vcombine.low %v919, %v920
        %v925 = vadd.f32 %v384, %v923
        %v927 = vcombine.high %v925, %v925
        %v929 = vpack.c.bf16 %v925, %v925
        %v930 = vpack.c.bf16 %v927, %v927
        %v933 = vcombine.low %v929, %v930
        %v935 = vunpack.c.l.s4 1983009808
        %v936 = vunpack.c.0.s8 %v935
        %v937 = vlaneseq
        %v938 = vshrl.u32 %v937, 7
        %v939 = vsub.s32 %v936, %v938
        %v940 = vrot.slane %v933, %v939
        %942 = vst [vmem:[%s355] sm:$0xf] %v940
        %s943 = sand.u32 %s232, 1
        %s944 = scalar_lea.sflag [#allocation5], %s943
        %s945 = sand.u32 %s232, 1
        %s946 = smul.addr %s945, 4
        %s947 = scalar_lea.vmem [#allocation7], %s946
        // Predicated region
        $region61: #{tpu_custom_call.1} parent=55 // pred_check
          %p948 = pneg %p242
        $region62: #{tpu_custom_call.1} parent=55 // pred_check_branch
          %950 = sbr.rel (%p948) target = $region64
        $region63: #{tpu_custom_call.1} parent=55 // pred_region
          %s952 = ssub.s32 64, 64
          %953 = vsyncadd %s944, %s952
          %s954 = smul.addr %s25, 2
          %s955 = smul.addr %s954, 32
          %s956 = scalar_lea.hbm %s9, %s955
          %s958 = sshll.u32 %s947, 4
          %s959 = int_to_ptr.vmem [resolvable:$true] %s958
          %961 = dma.vmem_to_hbm [thread:$0]  %s959, 64, %s956, %s944
        $region64: #{tpu_custom_call.1} parent=55 // pred_fallthru
          _
      $region56: #{tpu_custom_call.1} parent=5 // pred_fallthru
        _
      %p962 = scmp.le.s32.totalorder 2, %s20
      // Predicated region
      $region65: #{tpu_custom_call.1} parent=5 // pred_check
        %p963 = pneg %p962
      $region66: #{tpu_custom_call.1} parent=5 // pred_check_branch
        %965 = sbr.rel (%p963) target = $region68
      $region67: #{tpu_custom_call.1} parent=5 // pred_region
        %s966 = ssub.s32 %s20, 2
        // Predicated region
        $region69: #{tpu_custom_call.1} parent=67 // pred_check
          %p967 = pneg %p248
        $region70: #{tpu_custom_call.1} parent=67 // pred_check_branch
          %969 = sbr.rel (%p967) target = $region72
        $region71: #{tpu_custom_call.1} parent=67 // pred_region
          %s970 = sand.u32 %s233, 1
          %s971 = scalar_lea.sflag [#allocation5], %s970
          %s972 = sand.u32 %s233, 1
          %s973 = smul.addr %s972, 4
          %s974 = scalar_lea.vmem [#allocation7], %s973
          %975 = dma.done %s971, 64
        $region72: #{tpu_custom_call.1} parent=67 // pred_fallthru
          _
      $region68: #{tpu_custom_call.1} parent=5 // pred_fallthru
        _
    $region6: #{tpu_custom_call.1} parent=1 // loop_footer
      %s24 = sadd.s32 1, %s20
    $region7: #{tpu_custom_call.1} parent=1 // loop_footer_branch
      %19 = sbr.rel target = $region3
    $region8: #{tpu_custom_call.1} parent=1 // loop_exit
      _
    %976 = vsyncpa [#allocation5], 1
    %s977 = scalar_lea.sflag [#allocation5], 1
    %978 = vsyncpa %s977, 1
    %979 = vsyncpa [#allocation6], 1
    %s980 = scalar_lea.sflag [#allocation6], 1
    %981 = vsyncpa %s980, 1

</llo_original>
